<compile_context>
chip_gen: v5e
topology: v5e:2x2
jax: 0.10.0
libtpu: 0.0.40
codegen_flags: <defaults>
</compile_context>

<pallas_src>
import jax
import jax.numpy as jnp
from jax.experimental import pallas as pl
from jax.experimental.pallas import tpu as pltpu


def _round_up(v, m):
    return ((v + m - 1) // m) * m


# -----------------------------------------------------------------------------
# Kernel: local attention branch + fusion for one (1, THW, C) tile.
# -----------------------------------------------------------------------------
def _aff_kernel(x_ref, r_ref, xg_ref, w1_ref, b1_ref, w2_ref, b2_ref, o_ref):
    # Elementwise/EUP math in f32 (correct on v5e, which has no bf16 VPU/EUP).
    x = x_ref[0].astype(jnp.float32)      # (THW, C)
    res = r_ref[0].astype(jnp.float32)    # (THW, C)
    xa = x + res

    # Local branch: 1x1 conv -> [BN folded] -> ReLU -> 1x1 conv -> [BN folded].
    # MXU operands in the weights' dtype (bf16 by default), f32 accumulation.
    mxu_dt = w1_ref.dtype
    h = jnp.dot(xa.astype(mxu_dt), w1_ref[...],
                preferred_element_type=jnp.float32) + b1_ref[...]
    h = jnp.maximum(h, 0.0)
    xl = jnp.dot(h.astype(mxu_dt), w2_ref[...],
                 preferred_element_type=jnp.float32) + b2_ref[...]

    # Fuse with the (hoisted, precomputed) global branch; (1, C) broadcasts
    # over the THW rows.  Sigmoid runs on the EUP slot.
    wei = jax.nn.sigmoid(xl + xg_ref[0])

    # 2*x*wei + 2*res*(1-wei)  ==  2*(res + wei*(x-res))   (fewer VALU ops)
    o_ref[0] = (2.0 * (res + wei * (x - res))).astype(o_ref.dtype)


# -----------------------------------------------------------------------------
# Wrapper helpers
# -----------------------------------------------------------------------------
def _fold_bn(w, b, gamma, beta, mean, var, eps=1e-5):
    """Fold conv bias + inference BatchNorm into (W_eff, b_eff).

    y = BN(x @ W + b) = x @ (W*s) + (b - mean)*s + beta,  s = gamma/sqrt(var+eps)
    """
    s = gamma / jnp.sqrt(var + eps)
    w_eff = (w * s[None, :]).astype(jnp.float32)
    b_eff = ((b - mean) * s + beta).astype(jnp.float32)[None, :]
    return w_eff, b_eff


def _pad2(a, rows, cols):
    pr, pc = rows - a.shape[0], cols - a.shape[1]
    if pr == 0 and pc == 0:
        return a
    return jnp.pad(a, ((0, pr), (0, pc)))


def _vmem_plan(fixed_bytes):
    """Generation-aware (activation_budget, vmem_limit) in bytes."""
    try:
        cap = int(pltpu.get_tpu_info().vmem_capacity_bytes)
    except Exception:
        cap = 64 << 20  # conservative (v7x per-TC)
    cap = max(cap, 32 << 20)
    # v7x (64 MiB/TC): limit 48 MiB.  v5e/v6e (128 MiB): limit 96 MiB.
    vmem_limit = min((cap * 3) // 4, 96 << 20)
    # Leave headroom for compiler-internal scratch beyond our own estimates.
    act_budget = max(vmem_limit - fixed_bytes - (12 << 20), 8 << 20)
    return act_budget, vmem_limit


def aff_forward_nhwc(x, res, params, io_dtype=jnp.float32,
                     mxu_dtype=jnp.bfloat16):
    """Core entry point.  x, res: (N, H, W, C).  Returns (N, H, W, C) io_dtype."""
    N, H, W, C = x.shape
    HW = H * W
    Ci = params["w1"].shape[1]

    # Fold BN into the 1x1-conv weights/biases (plain-JAX glue).
    w1, b1 = _fold_bn(params["w1"], params["b1"], *params["bn1"])
    w2, b2 = _fold_bn(params["w2"], params["b2"], *params["bn2"])
    w1g, b1g = _fold_bn(params["w1g"], params["b1g"], *params["bn1g"])
    w2g, b2g = _fold_bn(params["w2g"], params["b2g"], *params["bn2g"])

    # Stream activations at io_dtype; the global-branch mean is taken from the
    # same cast tensors so XLA fuses cast + reduce into one read pass of x/res.
    xf = x.reshape(N, HW, C).astype(io_dtype)
    rf = res.reshape(N, HW, C).astype(io_dtype)

    # ---- global branch, hoisted out of the kernel (O(N*C*Ci), negligible) ----
    m = jnp.mean(xf.astype(jnp.float32) + rf.astype(jnp.float32),
                 axis=1, keepdims=True)                         # (N, 1, C)
    hg = jnp.maximum(jnp.einsum("nkc,ci->nki", m, w1g) + b1g, 0.0)
    xg = jnp.einsum("nki,ic->nkc", hg, w2g) + b2g               # (N, 1, C) f32

    # ---- lane-dense channel padding (no-op when C, Ci are multiples of 128) --
    # Zero-padded channels are exact: padded weights/biases are zero, so the
    # padded outputs are zero and sliced off.
    C_pad = _round_up(C, 128)
    Ci_pad = _round_up(Ci, 128)
    w1 = _pad2(w1, C_pad, Ci_pad).astype(mxu_dtype)   # bf16 MXU operands
    b1 = _pad2(b1, 1, Ci_pad)                          # biases stay f32
    w2 = _pad2(w2, Ci_pad, C_pad).astype(mxu_dtype)
    b2 = _pad2(b2, 1, C_pad)
    if C_pad != C:
        xf = jnp.pad(xf, ((0, 0), (0, 0), (0, C_pad - C)))
        rf = jnp.pad(rf, ((0, 0), (0, 0), (0, C_pad - C)))
        xg = jnp.pad(xg, ((0, 0), (0, 0), (0, C_pad - C)))

    io_size = jnp.dtype(io_dtype).itemsize
    mxu_size = jnp.dtype(mxu_dtype).itemsize

    # Single-buffered weights/biases + double-buffered per-sample xg.
    fixed_bytes = (2 * C_pad * Ci_pad * mxu_size
                   + 4 * (Ci_pad + C_pad)
                   + 2 * 4 * C_pad)
    act_budget, vmem_limit = _vmem_plan(fixed_bytes)

    # Per-row VMEM: double-buffered x/res/out I/O tiles + in-kernel f32
    # temporaries (xa, h, xl/wei, blend) + bf16 MXU operand copies (xa, h).
    per_row = (6 * C_pad * io_size
               + 4 * (3 * C_pad + 2 * Ci_pad)
               + mxu_size * (C_pad + Ci_pad))

    # ---- pick the HW tile: big, (16,128)-friendly, within the VMEM budget ----
    sub = 16 if io_size <= 2 else 8
    cap_rows = 1024 if io_size <= 2 else 512
    HW_pad = _round_up(HW, sub)
    if HW_pad != HW:
        xf = jnp.pad(xf, ((0, 0), (0, HW_pad - HW), (0, 0)))
        rf = jnp.pad(rf, ((0, 0), (0, HW_pad - HW), (0, 0)))
    THW = min(HW_pad, cap_rows)
    while THW > sub and THW * per_row > act_budget:
        THW = max(sub, _round_up(THW // 2, sub))
    n_hw = pl.cdiv(HW_pad, THW)

    act_spec = pl.BlockSpec((1, THW, C_pad), lambda n, h: (n, h, 0))
    # Constant blocks: never re-fetched, so keep a single VMEM buffer.
    const_spec = lambda shp: pl.BlockSpec(shp, lambda n, h: (0, 0),
                                          pipeline_mode=pl.Buffered(1))

    out = pl.pallas_call(
        _aff_kernel,
        out_shape=jax.ShapeDtypeStruct((N, HW_pad, C_pad), io_dtype),
        grid_spec=pltpu.PrefetchScalarGridSpec(
            num_scalar_prefetch=0,
            grid=(N, n_hw),
            in_specs=[
                act_spec,                                             # x tile
                act_spec,                                             # residual tile
                pl.BlockSpec((1, 1, C_pad), lambda n, h: (n, 0, 0)),  # xg (per-sample)
                const_spec((C_pad, Ci_pad)),                          # w1 (BN folded, bf16)
                const_spec((1, Ci_pad)),                              # b1 (f32)
                const_spec((Ci_pad, C_pad)),                          # w2 (BN folded, bf16)
                const_spec((1, C_pad)),                               # b2 (f32)
            ],
            out_specs=act_spec,
        ),
        compiler_params=pltpu.CompilerParams(
            dimension_semantics=("parallel", "parallel"),
            vmem_limit_bytes=vmem_limit,
        ),
    )(xf, rf, xg, w1, b1, w2, b2)

    if HW_pad != HW:
        out = out[:, :HW, :]
    if C_pad != C:
        # TODO(synk): keep the padded-C layout downstream to avoid this extra
        # HBM pass when C is not a multiple of 128 (no-op at C=2048).
        out = out[..., :C]
    return out.reshape(N, H, W, C)


def aff_forward(x_nchw, res_nchw, params, io_dtype=jnp.float32,
                mxu_dtype=jnp.bfloat16):
    """NCHW wrapper matching the PyTorch module's layout.

    NOTE: the NCHW<->NHWC transposes each cost an extra HBM round trip; keep
    the surrounding model in NHWC and call aff_forward_nhwc directly when
    possible.
    """
    x = jnp.transpose(x_nchw, (0, 2, 3, 1))
    res = jnp.transpose(res_nchw, (0, 2, 3, 1))
    out = aff_forward_nhwc(x, res, params, io_dtype=io_dtype,
                           mxu_dtype=mxu_dtype)
    return jnp.transpose(out, (0, 3, 1, 2))


# -----------------------------------------------------------------------------
# Pure-JAX reference of the same folded-BN forward (NCHW in/out, f32).
# -----------------------------------------------------------------------------
def _reference(x, res, params):
    N, C, H, W = x.shape
    xa = x + res
    xf = jnp.transpose(xa, (0, 2, 3, 1)).reshape(N, H * W, C)

    w1, b1 = _fold_bn(params["w1"], params["b1"], *params["bn1"])
    w2, b2 = _fold_bn(params["w2"], params["b2"], *params["bn2"])
    w1g, b1g = _fold_bn(params["w1g"], params["b1g"], *params["bn1g"])
    w2g, b2g = _fold_bn(params["w2g"], params["b2g"], *params["bn2g"])

    h = jnp.maximum(xf @ w1 + b1, 0.0)
    xl = h @ w2 + b2
    m = jnp.mean(xf, axis=1, keepdims=True)
    hg = jnp.maximum(m @ w1g + b1g, 0.0)
    xg = hg @ w2g + b2g
    wei = jax.nn.sigmoid(xl + xg)
    xflat = jnp.transpose(x, (0, 2, 3, 1)).reshape(N, H * W, C)
    rflat = jnp.transpose(res, (0, 2, 3, 1)).reshape(N, H * W, C)
    out = 2.0 * xflat * wei + 2.0 * rflat * (1.0 - wei)
    return jnp.transpose(out.reshape(N, H, W, C), (0, 3, 1, 2))


def make_params(key, channels, r):
    inter = channels // r
    ks = jax.random.split(key, 20)

    def bn(k, n):
        k1, k2, k3, k4 = jax.random.split(k, 4)
        gamma = 1.0 + 0.1 * jax.random.normal(k1, (n,), jnp.float32)
        beta = 0.1 * jax.random.normal(k2, (n,), jnp.float32)
        mean = 0.05 * jax.random.normal(k3, (n,), jnp.float32)
        var = jnp.abs(1.0 + 0.1 * jax.random.normal(k4, (n,), jnp.float32))
        return (gamma, beta, mean, var)

    s1 = 1.0 / jnp.sqrt(channels)
    s2 = 1.0 / jnp.sqrt(inter)
    return {
        # 1x1 conv weights stored as (in_ch, out_ch) matrices.
        "w1": s1 * jax.random.normal(ks[0], (channels, inter), jnp.float32),
        "b1": s1 * jax.random.normal(ks[1], (inter,), jnp.float32),
        "bn1": bn(ks[2], inter),
        "w2": s2 * jax.random.normal(ks[3], (inter, channels), jnp.float32),
        "b2": s2 * jax.random.normal(ks[4], (channels,), jnp.float32),
        "bn2": bn(ks[5], channels),
        "w1g": s1 * jax.random.normal(ks[6], (channels, inter), jnp.float32),
        "b1g": s1 * jax.random.normal(ks[7], (inter,), jnp.float32),
        "bn1g": bn(ks[8], inter),
        "w2g": s2 * jax.random.normal(ks[9], (inter, channels), jnp.float32),
        "b2g": s2 * jax.random.normal(ks[10], (channels,), jnp.float32),
        "bn2g": bn(ks[11], channels),
    }


def _max_rel_err(a, b):
    a = jnp.asarray(a, jnp.float32)
    b = jnp.asarray(b, jnp.float32)
    return float(jnp.max(jnp.abs(a - b)) / (jnp.max(jnp.abs(b)) + 1e-6))


if __name__ == "__main__":
    # Small shapes consistent with AFF(channels=C, r=4): x, residual -> (N, C, H, W)
    N, C, H, W, r = 2, 32, 8, 8, 4
    key = jax.random.PRNGKey(0)
    kx, kr, kp = jax.random.split(key, 3)

    x = jax.random.normal(kx, (N, C, H, W), jnp.float32)
    res = jax.random.normal(kr, (N, C, H, W), jnp.float32)
    params = make_params(kp, C, r)

    ref = jax.block_until_ready(_reference(x, res, params))

    # 1) Full-precision check (f32 I/O, f32 MXU operands): must match tightly.
    out_f32 = jax.block_until_ready(
        aff_forward(x, res, params, io_dtype=jnp.float32, mxu_dtype=jnp.float32))
    assert out_f32.shape == (N, C, H, W)
    assert _max_rel_err(out_f32, ref) < 1e-4

    # 2) Default performance config (f32 I/O, bf16 MXU operands + f32 accum).
    out = jax.block_until_ready(aff_forward(x, res, params))
    assert out.shape == (N, C, H, W)
    assert _max_rel_err(out, ref) < 3e-2

    # 3) bf16 I/O path (HBM-bandwidth optimization) against a reference that
    #    applies the same input-cast policy.
    x_bf = x.astype(jnp.bfloat16)
    res_bf = res.astype(jnp.bfloat16)
    out_bf = jax.block_until_ready(
        aff_forward(x_bf, res_bf, params, io_dtype=jnp.bfloat16))
    ref_bf = _reference(x_bf.astype(jnp.float32), res_bf.astype(jnp.float32),
                        params)
    assert out_bf.dtype == jnp.bfloat16
    assert _max_rel_err(out_bf, ref_bf) < 4e-2

    print("KERNEL_OK")
</pallas_src>

<mosaic_0001>
module attributes {stable_mosaic.version = 11 : i64} {
  func.func @_aff_kernel(%arg0: i32, %arg1: i32, %arg2: memref<1x64x128xf32, #tpu.memory_space<vmem>>, %arg3: memref<1x64x128xf32, #tpu.memory_space<vmem>>, %arg4: memref<1x1x128xf32, #tpu.memory_space<vmem>>, %arg5: memref<128x128xf32, #tpu.memory_space<vmem>>, %arg6: memref<1x128xf32, #tpu.memory_space<vmem>>, %arg7: memref<128x128xf32, #tpu.memory_space<vmem>>, %arg8: memref<1x128xf32, #tpu.memory_space<vmem>>, %arg9: memref<1x64x128xf32, #tpu.memory_space<vmem>>) attributes {dimension_semantics = [#tpu.dimension_semantics<parallel>, #tpu.dimension_semantics<parallel>], iteration_bounds = array<i64: 2, 1>, scalar_prefetch = 0 : i64, scratch_operands = 0 : i64, tpu.core_type = #tpu.core_type<tc>, window_params = [{transform_indices = @transform_0, window_bounds = array<i64: 1, 64, 128>}, {transform_indices = @transform_1, window_bounds = array<i64: 1, 64, 128>}, {transform_indices = @transform_2, window_bounds = array<i64: 1, 1, 128>}, {pipeline_mode = #tpu.pipeline_mode<synchronous>, transform_indices = @transform_3, window_bounds = array<i64: 128, 128>}, {pipeline_mode = #tpu.pipeline_mode<synchronous>, transform_indices = @transform_4, window_bounds = array<i64: 1, 128>}, {pipeline_mode = #tpu.pipeline_mode<synchronous>, transform_indices = @transform_5, window_bounds = array<i64: 128, 128>}, {pipeline_mode = #tpu.pipeline_mode<synchronous>, transform_indices = @transform_6, window_bounds = array<i64: 1, 128>}, {transform_indices = @transform_7, window_bounds = array<i64: 1, 64, 128>}]} {
    %c0 = arith.constant 0 : index
    %c0_0 = arith.constant 0 : index
    %c0_1 = arith.constant 0 : index
    %0 = vector.load %arg2[%c0, %c0_0, %c0_1] : memref<1x64x128xf32, #tpu.memory_space<vmem>>, vector<1x64x128xf32>
    %1 = vector.shape_cast %0 : vector<1x64x128xf32> to vector<64x128xf32>
    %c0_2 = arith.constant 0 : index
    %c0_3 = arith.constant 0 : index
    %c0_4 = arith.constant 0 : index
    %2 = vector.load %arg3[%c0_2, %c0_3, %c0_4] : memref<1x64x128xf32, #tpu.memory_space<vmem>>, vector<1x64x128xf32>
    %3 = vector.shape_cast %2 : vector<1x64x128xf32> to vector<64x128xf32>
    %4 = arith.addf %1, %3 : vector<64x128xf32>
    %c0_5 = arith.constant 0 : index
    %c0_6 = arith.constant 0 : index
    %5 = vector.load %arg5[%c0_5, %c0_6] : memref<128x128xf32, #tpu.memory_space<vmem>>, vector<128x128xf32>
    %cst = arith.constant dense<0.000000e+00> : vector<64x128xf32>
    %6 = tpu.matmul %4, %5, %cst {dimension_numbers = #tpu.dot_dimension_numbers<[1], [0], [0], [1], [0, 0, 1, 1], [], []>} : vector<64x128xf32>, vector<128x128xf32>, vector<64x128xf32> -> vector<64x128xf32>
    %c0_7 = arith.constant 0 : index
    %c0_8 = arith.constant 0 : index
    %7 = vector.load %arg6[%c0_7, %c0_8] : memref<1x128xf32, #tpu.memory_space<vmem>>, vector<1x128xf32>
    %8 = vector.broadcast %7 : vector<1x128xf32> to vector<64x128xf32>
    %9 = arith.addf %6, %8 : vector<64x128xf32>
    %cst_9 = arith.constant 0.000000e+00 : f32
    %10 = vector.broadcast %cst_9 : f32 to vector<64x128xf32>
    %11 = arith.maximumf %9, %10 : vector<64x128xf32>
    %c0_10 = arith.constant 0 : index
    %c0_11 = arith.constant 0 : index
    %12 = vector.load %arg7[%c0_10, %c0_11] : memref<128x128xf32, #tpu.memory_space<vmem>>, vector<128x128xf32>
    %cst_12 = arith.constant dense<0.000000e+00> : vector<64x128xf32>
    %13 = tpu.matmul %11, %12, %cst_12 {dimension_numbers = #tpu.dot_dimension_numbers<[1], [0], [0], [1], [0, 0, 1, 1], [], []>} : vector<64x128xf32>, vector<128x128xf32>, vector<64x128xf32> -> vector<64x128xf32>
    %c0_13 = arith.constant 0 : index
    %c0_14 = arith.constant 0 : index
    %14 = vector.load %arg8[%c0_13, %c0_14] : memref<1x128xf32, #tpu.memory_space<vmem>>, vector<1x128xf32>
    %15 = vector.broadcast %14 : vector<1x128xf32> to vector<64x128xf32>
    %16 = arith.addf %13, %15 : vector<64x128xf32>
    %c0_15 = arith.constant 0 : index
    %c0_16 = arith.constant 0 : index
    %c0_17 = arith.constant 0 : index
    %17 = vector.load %arg4[%c0_15, %c0_16, %c0_17] : memref<1x1x128xf32, #tpu.memory_space<vmem>>, vector<1x1x128xf32>
    %18 = vector.shape_cast %17 : vector<1x1x128xf32> to vector<1x128xf32>
    %19 = vector.broadcast %18 : vector<1x128xf32> to vector<64x128xf32>
    %20 = arith.addf %16, %19 : vector<64x128xf32>
    %21 = arith.negf %20 : vector<64x128xf32>
    %22 = math.exp %21 : vector<64x128xf32>
    %cst_18 = arith.constant 1.000000e+00 : f32
    %23 = vector.broadcast %cst_18 : f32 to vector<64x128xf32>
    %24 = arith.addf %23, %22 : vector<64x128xf32>
    %25 = arith.divf %23, %24 : vector<64x128xf32>
    %26 = arith.subf %1, %3 : vector<64x128xf32>
    %27 = arith.mulf %25, %26 : vector<64x128xf32>
    %28 = arith.addf %3, %27 : vector<64x128xf32>
    %cst_19 = arith.constant 2.000000e+00 : f32
    %29 = vector.broadcast %cst_19 : f32 to vector<64x128xf32>
    %30 = arith.mulf %29, %28 : vector<64x128xf32>
    %c0_20 = arith.constant 0 : index
    %c0_21 = arith.constant 0 : index
    %c0_22 = arith.constant 0 : index
    %31 = vector.load %arg9[%c0_20, %c0_21, %c0_22] : memref<1x64x128xf32, #tpu.memory_space<vmem>>, vector<1x64x128xf32>
    %32 = vector.shape_cast %31 : vector<1x64x128xf32> to vector<64x128xf32>
    %33 = vector.shape_cast %30 : vector<64x128xf32> to vector<1x64x128xf32>
    tpu.vector_store %arg9[%c0_20, %c0_21, %c0_22], %33 {strides = array<i32>} : memref<1x64x128xf32, #tpu.memory_space<vmem>>, vector<1x64x128xf32>,
    return
  }
  func.func @transform_0(%arg0: i32, %arg1: i32) -> (i32, i32, i32) {
    %c0_i32 = arith.constant 0 : i32
    %c0_i32_0 = arith.constant 0 : i32
    return %arg0, %arg1, %c0_i32 : i32, i32, i32
  }
  func.func @transform_1(%arg0: i32, %arg1: i32) -> (i32, i32, i32) {
    %c0_i32 = arith.constant 0 : i32
    %c0_i32_0 = arith.constant 0 : i32
    return %arg0, %arg1, %c0_i32 : i32, i32, i32
  }
  func.func @transform_2(%arg0: i32, %arg1: i32) -> (i32, i32, i32) {
    %c0_i32 = arith.constant 0 : i32
    %c0_i32_0 = arith.constant 0 : i32
    %c0_i32_1 = arith.constant 0 : i32
    return %arg0, %c0_i32, %c0_i32_0 : i32, i32, i32
  }
  func.func @transform_3(%arg0: i32, %arg1: i32) -> (i32, i32) {
    %c0_i32 = arith.constant 0 : i32
    %c0_i32_0 = arith.constant 0 : i32
    %c0_i32_1 = arith.constant 0 : i32
    return %c0_i32, %c0_i32_0 : i32, i32
  }
  func.func @transform_4(%arg0: i32, %arg1: i32) -> (i32, i32) {
    %c0_i32 = arith.constant 0 : i32
    %c0_i32_0 = arith.constant 0 : i32
    %c0_i32_1 = arith.constant 0 : i32
    return %c0_i32, %c0_i32_0 : i32, i32
  }
  func.func @transform_5(%arg0: i32, %arg1: i32) -> (i32, i32) {
    %c0_i32 = arith.constant 0 : i32
    %c0_i32_0 = arith.constant 0 : i32
    %c0_i32_1 = arith.constant 0 : i32
    return %c0_i32, %c0_i32_0 : i32, i32
  }
  func.func @transform_6(%arg0: i32, %arg1: i32) -> (i32, i32) {
    %c0_i32 = arith.constant 0 : i32
    %c0_i32_0 = arith.constant 0 : i32
    %c0_i32_1 = arith.constant 0 : i32
    return %c0_i32, %c0_i32_0 : i32, i32
  }
  func.func @transform_7(%arg0: i32, %arg1: i32) -> (i32, i32, i32) {
    %c0_i32 = arith.constant 0 : i32
    %c0_i32_0 = arith.constant 0 : i32
    return %arg0, %arg1, %c0_i32 : i32, i32, i32
  }
}

</mosaic_0001>

<llo_original>
// kernel: tpu_custom_call.1
$region0: #{tpu_custom_call.1}
  #allocation0 [shape = 'u32[]', space=smem, size = 0x4, offset = 0x4, fixed_abs, tag = 'smem constant byte address 0x4 - core index']
  #allocation1 [shape = 'u32[72,128]{1,0:T(1,128)}', space=vmem, size = 0x9000, scoped, tag = 'internal scratch']
  %s0 = inlined_call_operand.hbm [shape: f32[2,64,128], index: 0, kind: input, shape index: {}]
  %s1 = inlined_call_operand.hbm [shape: f32[2,64,128], index: 1, kind: input, shape index: {}]
  %s2 = inlined_call_operand.hbm [shape: f32[2,1,128], index: 2, kind: input, shape index: {}]
  %s3 = inlined_call_operand.hbm [shape: f32[128,128], index: 3, kind: input, shape index: {}]
  %s4 = inlined_call_operand.vmem [shape: f32[1,128], index: 4, kind: input, shape index: {}]
  %s5 = inlined_call_operand.hbm [shape: f32[128,128], index: 5, kind: input, shape index: {}]
  %s6 = inlined_call_operand.vmem [shape: f32[1,128], index: 6, kind: input, shape index: {}]
  %s7 = inlined_call_operand.hbm [shape: f32[2,64,128], index: 7, kind: output, shape index: {}]
  %s8 = sld [smem:[#allocation0]]
  $region81: #{tpu_custom_call.1} parent=0
    _
  %s10 = ssub.s32 1, %s8
  %s11 = scalar_select 0, %s10, %s8
  $region1: #{tpu_custom_call.1} parent=0
    #allocation2 [shape = 'u8[65536]{0}', space=vmem, size = 0x10000, scoped, tag = 'input window, operand 0']
    #allocation3 [shape = 's32[2]{0}', space=sflag, size = 0x8, scoped, tag = 'scoped memory for tpu_custom_call.1']
    #allocation4 [shape = 's32[2]{0}', space=sflag, size = 0x8, scoped, tag = 'scoped memory for tpu_custom_call.1']
    #allocation5 [shape = 'u8[65536]{0}', space=vmem, size = 0x10000, scoped, tag = 'input window, operand 1']
    #allocation6 [shape = 's32[2]{0}', space=sflag, size = 0x8, scoped, tag = 'scoped memory for tpu_custom_call.1']
    #allocation7 [shape = 'u8[1024]{0}', space=vmem, size = 0x400, scoped, tag = 'input window, operand 2']
    #allocation8 [shape = 'u8[65536]{0}', space=vmem, size = 0x10000, scoped, tag = 'input window, operand 3, single buffered']
    #allocation9 [shape = 's32[1]{0}', space=sflag, size = 0x4, scoped, tag = 'scoped memory for tpu_custom_call.1']
    #allocation10 [shape = 'u8[65536]{0}', space=vmem, size = 0x10000, scoped, tag = 'input window, operand 5, single buffered']
    #allocation11 [shape = 'u8[65536]{0}', space=vmem, size = 0x10000, scoped, tag = 'output window, operand 0']
    %12 = vsyncpa [#allocation3], 0
    %s13 = scalar_lea.sflag [#allocation3], 1
    %14 = vsyncpa %s13, 0
    %15 = vsyncpa [#allocation6], 0
    %s16 = scalar_lea.sflag [#allocation6], 1
    %17 = vsyncpa %s16, 0
    %18 = vsyncpa [#allocation9], 0
    %19 = vsyncpa [#allocation4], 0
    %s20 = scalar_lea.sflag [#allocation4], 1
    %21 = vsyncpa %s20, 0
    loop: start=0, step=1, limit=4
    $region2: #{tpu_custom_call.1} parent=1 // loop_pre_header
      _
    $region3: #{tpu_custom_call.1} parent=1 // loop_header
      %s23 = sphi 0, %s27
      %p24 = scmp.ge.s32.totalorder %s23, 4
      %s30 = sphi 0, %s42
      %s31 = sphi 0, %s38
      %s32 = sphi 0, %s30
      %s33 = sphi 0, %s31
      %s34 = sphi 0, %s32
      %s35 = sphi 0, %s33
      %s47 = sphi 0, %s49
      %s50 = sphi 0, %s47
      %s51 = sphi 0, %s50
      %s67 = sphi 0, %s51
      %s75 = sphi 0, %s77
      %s78 = sphi 0, %s75
      %s79 = sphi 0, %s78
      %s95 = sphi 0, %s79
      %s101 = sphi 0, %s103
      %s104 = sphi 0, %s101
      %s105 = sphi 0, %s104
      %s121 = sphi 0, %s105
      %s125 = sphi 0, %s125
      %s127 = sphi 0, %s125
      %s128 = sphi 0, %s127
      %s142 = sphi 0, %s128
      %s146 = sphi 0, %s146
      %s148 = sphi 0, %s146
      %s149 = sphi 0, %s148
      %s163 = sphi 0, %s149
      %s167 = sphi 0, %s167
      %s169 = sphi 0, %s167
      %s170 = sphi 0, %s169
      %s184 = sphi 0, %s170
      %s188 = sphi 0, %s188
      %s190 = sphi 0, %s188
      %s191 = sphi 0, %s190
      %s205 = sphi 0, %s191
      %s213 = sphi 0, %s215
      %s216 = sphi 0, %s213
      %s217 = sphi 0, %s216
      %s233 = sphi 0, %s217
    $region4: #{tpu_custom_call.1} parent=1 // loop_header_branch
      %26 = sbr.rel (%p24) target = $region8
    $region5: #{tpu_custom_call.1} parent=1 // loop_body
      %s28 = ssub.s32 %s23, 1
      %s29 = ssub.s32 %s23, 2
      %s36 = sadd.s32 1, %s31
      %p37 = scmp.ge.s32.totalorder %s36, 1
      %s38 = scalar_select %p37, 0, %s36
      %s39 = sadd.s32 1, %s30
      %s40 = scalar_select %p37, %s39, %s30
      %p41 = scmp.ge.s32.totalorder %s40, 2
      %s42 = scalar_select %p41, 0, %s40
      %s43 = ssub.s32 %s30, %s42
      %s44 = ssub.s32 %s31, %s38
      %s45 = sor.u32 %s43, %s44
      %p46 = scmp.eq.s32.totalorder %s45, 0
      %s48 = sadd.s32 %s47, 1
      %s49 = scalar_select %p46, %s47, %s48
      %p52 = pneg %p46
      %p53 = scmp.eq.s32.totalorder %s23, 1
      %p54 = por %p52, %p53
      %p55 = scmp.ne.s32.totalorder %s47, %s50
      %p56 = scmp.eq.s32.totalorder %s23, 0
      %p57 = por %p55, %p56
      %p58 = scmp.ne.s32.totalorder %s47, %s50
      %p59 = scmp.eq.s32.totalorder %s28, 1
      %p60 = por %p58, %p59
      %p61 = scmp.ne.s32.totalorder %s50, %s51
      %p62 = scmp.eq.s32.totalorder %s28, 0
      %p63 = por %p61, %p62
      %p64 = scmp.ne.s32.totalorder %s50, %s51
      %p65 = scmp.eq.s32.totalorder %s29, 1
      %p66 = por %p64, %p65
      %p68 = scmp.ne.s32.totalorder %s51, %s67
      %p69 = scmp.eq.s32.totalorder %s29, 0
      %p70 = por %p68, %p69
      %s71 = ssub.s32 %s30, %s42
      %s72 = ssub.s32 %s31, %s38
      %s73 = sor.u32 %s71, %s72
      %p74 = scmp.eq.s32.totalorder %s73, 0
      %s76 = sadd.s32 %s75, 1
      %s77 = scalar_select %p74, %s75, %s76
      %p80 = pneg %p74
      %p81 = scmp.eq.s32.totalorder %s23, 1
      %p82 = por %p80, %p81
      %p83 = scmp.ne.s32.totalorder %s75, %s78
      %p84 = scmp.eq.s32.totalorder %s23, 0
      %p85 = por %p83, %p84
      %p86 = scmp.ne.s32.totalorder %s75, %s78
      %p87 = scmp.eq.s32.totalorder %s28, 1
      %p88 = por %p86, %p87
      %p89 = scmp.ne.s32.totalorder %s78, %s79
      %p90 = scmp.eq.s32.totalorder %s28, 0
      %p91 = por %p89, %p90
      %p92 = scmp.ne.s32.totalorder %s78, %s79
      %p93 = scmp.eq.s32.totalorder %s29, 1
      %p94 = por %p92, %p93
      %p96 = scmp.ne.s32.totalorder %s79, %s95
      %p97 = scmp.eq.s32.totalorder %s29, 0
      %p98 = por %p96, %p97
      %s99 = ssub.s32 %s30, %s42
      %p100 = scmp.eq.s32.totalorder %s99, 0
      %s102 = sadd.s32 %s101, 1
      %s103 = scalar_select %p100, %s101, %s102
      %p106 = pneg %p100
      %p107 = scmp.eq.s32.totalorder %s23, 1
      %p108 = por %p106, %p107
      %p109 = scmp.ne.s32.totalorder %s101, %s104
      %p110 = scmp.eq.s32.totalorder %s23, 0
      %p111 = por %p109, %p110
      %p112 = scmp.ne.s32.totalorder %s101, %s104
      %p113 = scmp.eq.s32.totalorder %s28, 1
      %p114 = por %p112, %p113
      %p115 = scmp.ne.s32.totalorder %s104, %s105
      %p116 = scmp.eq.s32.totalorder %s28, 0
      %p117 = por %p115, %p116
      %p118 = scmp.ne.s32.totalorder %s104, %s105
      %p119 = scmp.eq.s32.totalorder %s29, 1
      %p120 = por %p118, %p119
      %p122 = scmp.ne.s32.totalorder %s105, %s121
      %p123 = scmp.eq.s32.totalorder %s29, 0
      %p124 = por %p122, %p123
      %s126 = sadd.s32 %s125, 1
      %p129 = scmp.eq.s32.totalorder %s23, 1
      %p130 = scmp.ne.s32.totalorder %s125, %s127
      %p131 = scmp.eq.s32.totalorder %s23, 0
      %p132 = por %p130, %p131
      %p133 = scmp.ne.s32.totalorder %s125, %s127
      %p134 = scmp.eq.s32.totalorder %s28, 1
      %p135 = por %p133, %p134
      %p136 = scmp.ne.s32.totalorder %s127, %s128
      %p137 = scmp.eq.s32.totalorder %s28, 0
      %p138 = por %p136, %p137
      %p139 = scmp.ne.s32.totalorder %s127, %s128
      %p140 = scmp.eq.s32.totalorder %s29, 1
      %p141 = por %p139, %p140
      %p143 = scmp.ne.s32.totalorder %s128, %s142
      %p144 = scmp.eq.s32.totalorder %s29, 0
      %p145 = por %p143, %p144
      %s147 = sadd.s32 %s146, 1
      %p150 = scmp.eq.s32.totalorder %s23, 1
      %p151 = scmp.ne.s32.totalorder %s146, %s148
      %p152 = scmp.eq.s32.totalorder %s23, 0
      %p153 = por %p151, %p152
      %p154 = scmp.ne.s32.totalorder %s146, %s148
      %p155 = scmp.eq.s32.totalorder %s28, 1
      %p156 = por %p154, %p155
      %p157 = scmp.ne.s32.totalorder %s148, %s149
      %p158 = scmp.eq.s32.totalorder %s28, 0
      %p159 = por %p157, %p158
      %p160 = scmp.ne.s32.totalorder %s148, %s149
      %p161 = scmp.eq.s32.totalorder %s29, 1
      %p162 = por %p160, %p161
      %p164 = scmp.ne.s32.totalorder %s149, %s163
      %p165 = scmp.eq.s32.totalorder %s29, 0
      %p166 = por %p164, %p165
      %s168 = sadd.s32 %s167, 1
      %p171 = scmp.eq.s32.totalorder %s23, 1
      %p172 = scmp.ne.s32.totalorder %s167, %s169
      %p173 = scmp.eq.s32.totalorder %s23, 0
      %p174 = por %p172, %p173
      %p175 = scmp.ne.s32.totalorder %s167, %s169
      %p176 = scmp.eq.s32.totalorder %s28, 1
      %p177 = por %p175, %p176
      %p178 = scmp.ne.s32.totalorder %s169, %s170
      %p179 = scmp.eq.s32.totalorder %s28, 0
      %p180 = por %p178, %p179
      %p181 = scmp.ne.s32.totalorder %s169, %s170
      %p182 = scmp.eq.s32.totalorder %s29, 1
      %p183 = por %p181, %p182
      %p185 = scmp.ne.s32.totalorder %s170, %s184
      %p186 = scmp.eq.s32.totalorder %s29, 0
      %p187 = por %p185, %p186
      %s189 = sadd.s32 %s188, 1
      %p192 = scmp.eq.s32.totalorder %s23, 1
      %p193 = scmp.ne.s32.totalorder %s188, %s190
      %p194 = scmp.eq.s32.totalorder %s23, 0
      %p195 = por %p193, %p194
      %p196 = scmp.ne.s32.totalorder %s188, %s190
      %p197 = scmp.eq.s32.totalorder %s28, 1
      %p198 = por %p196, %p197
      %p199 = scmp.ne.s32.totalorder %s190, %s191
      %p200 = scmp.eq.s32.totalorder %s28, 0
      %p201 = por %p199, %p200
      %p202 = scmp.ne.s32.totalorder %s190, %s191
      %p203 = scmp.eq.s32.totalorder %s29, 1
      %p204 = por %p202, %p203
      %p206 = scmp.ne.s32.totalorder %s191, %s205
      %p207 = scmp.eq.s32.totalorder %s29, 0
      %p208 = por %p206, %p207
      %s209 = ssub.s32 %s30, %s42
      %s210 = ssub.s32 %s31, %s38
      %s211 = sor.u32 %s209, %s210
      %p212 = scmp.eq.s32.totalorder %s211, 0
      %s214 = sadd.s32 %s213, 1
      %s215 = scalar_select %p212, %s213, %s214
      %p218 = pneg %p212
      %p219 = scmp.eq.s32.totalorder %s23, 1
      %p220 = por %p218, %p219
      %p221 = scmp.ne.s32.totalorder %s213, %s216
      %p222 = scmp.eq.s32.totalorder %s23, 0
      %p223 = por %p221, %p222
      %p224 = scmp.ne.s32.totalorder %s213, %s216
      %p225 = scmp.eq.s32.totalorder %s28, 1
      %p226 = por %p224, %p225
      %p227 = scmp.ne.s32.totalorder %s216, %s217
      %p228 = scmp.eq.s32.totalorder %s28, 0
      %p229 = por %p227, %p228
      %p230 = scmp.ne.s32.totalorder %s216, %s217
      %p231 = scmp.eq.s32.totalorder %s29, 1
      %p232 = por %p230, %p231
      %p234 = scmp.ne.s32.totalorder %s217, %s233
      %p235 = scmp.eq.s32.totalorder %s29, 0
      %p236 = por %p234, %p235
      %p237 = scmp.le.s32.totalorder 1, %s23
      %p238 = scmp.lt.s32.totalorder %s23, 3
      %p239 = pnand %p237, %p238
      %p240 = pneg %p239
      // Predicated region
      $region9: #{tpu_custom_call.1} parent=5 // pred_check
        _
      $region10: #{tpu_custom_call.1} parent=5 // pred_check_branch
        %242 = sbr.rel (%p239) target = $region12
      $region11: #{tpu_custom_call.1} parent=5 // pred_region
        %s243 = ssub.s32 %s23, 1
        // Predicated region
        $region13: #{tpu_custom_call.1} parent=11 // pred_check
          %p244 = pneg %p138
        $region14: #{tpu_custom_call.1} parent=11 // pred_check_branch
          %246 = sbr.rel (%p244) target = $region16
        $region15: #{tpu_custom_call.1} parent=11 // pred_region
          %248 = vsyncadd [#allocation9], 0
          %s249 = sshll.u32 %s3, 4
          %s250 = int_to_ptr.hbm [resolvable:$true] %s249
          %s251 = sshll.u32 [#allocation8], 4
          %s252 = int_to_ptr.vmem [resolvable:$true] %s251
          %257 = dma.hbm_to_vmem [thread:$0]  %s250, 2048, %s252, [#allocation9], 128, 128, 8
        $region16: #{tpu_custom_call.1} parent=11 // pred_fallthru
          _
        // Predicated region
        $region17: #{tpu_custom_call.1} parent=11 // pred_check
          %p258 = pneg %p159
        $region18: #{tpu_custom_call.1} parent=11 // pred_check_branch
          %260 = sbr.rel (%p258) target = $region20
        $region19: #{tpu_custom_call.1} parent=11 // pred_region
          _
        $region20: #{tpu_custom_call.1} parent=11 // pred_fallthru
          _
        // Predicated region
        $region21: #{tpu_custom_call.1} parent=11 // pred_check
          %p261 = pneg %p180
        $region22: #{tpu_custom_call.1} parent=11 // pred_check_branch
          %263 = sbr.rel (%p261) target = $region24
        $region23: #{tpu_custom_call.1} parent=11 // pred_region
          %265 = vsyncadd [#allocation9], 0
          %s266 = sshll.u32 %s5, 4
          %s267 = int_to_ptr.hbm [resolvable:$true] %s266
          %s268 = sshll.u32 [#allocation10], 4
          %s269 = int_to_ptr.vmem [resolvable:$true] %s268
          %274 = dma.hbm_to_vmem [thread:$0]  %s267, 2048, %s269, [#allocation9], 128, 128, 8
        $region24: #{tpu_custom_call.1} parent=11 // pred_fallthru
          _
        // Predicated region
        $region25: #{tpu_custom_call.1} parent=11 // pred_check
          %p275 = pneg %p201
        $region26: #{tpu_custom_call.1} parent=11 // pred_check_branch
          %277 = sbr.rel (%p275) target = $region28
        $region27: #{tpu_custom_call.1} parent=11 // pred_region
          _
        $region28: #{tpu_custom_call.1} parent=11 // pred_fallthru
          _
      $region12: #{tpu_custom_call.1} parent=5 // pred_fallthru
        _
      %p278 = scmp.lt.s32.totalorder %s23, 2
      // Predicated region
      $region29: #{tpu_custom_call.1} parent=5 // pred_check
        %p279 = pneg %p278
      $region30: #{tpu_custom_call.1} parent=5 // pred_check_branch
        %281 = sbr.rel (%p279) target = $region32
      $region31: #{tpu_custom_call.1} parent=5 // pred_region
        // Predicated region
        $region33: #{tpu_custom_call.1} parent=31 // pred_check
          %p282 = pneg %p57
        $region34: #{tpu_custom_call.1} parent=31 // pred_check_branch
          %284 = sbr.rel (%p282) target = $region36
        $region35: #{tpu_custom_call.1} parent=31 // pred_region
          %s285 = sand.u32 %s47, 1
          %s286 = scalar_lea.sflag [#allocation3], %s285
          %s287 = sand.u32 %s47, 1
          %s288 = smul.addr %s287, 64
          %s289 = scalar_lea.vmem [#allocation2], %s288
          %s290 = smul.u32 8, %s31
          %292 = vsyncadd %s286, 0
          %s293 = smul.addr %s30, 8
          %s294 = sadd.s32 %s290, %s293
          %s295 = smul.addr %s294, 8
          %s296 = scalar_lea.hbm %s0, %s295
          %s297 = sshll.u32 %s296, 4
          %s298 = int_to_ptr.hbm [resolvable:$true] %s297
          %s299 = sshll.u32 %s289, 4
          %s300 = int_to_ptr.vmem [resolvable:$true] %s299
          %305 = dma.hbm_to_vmem [thread:$0]  %s298, 1024, %s300, %s286, 128, 128, 8
        $region36: #{tpu_custom_call.1} parent=31 // pred_fallthru
          _
        // Predicated region
        $region37: #{tpu_custom_call.1} parent=31 // pred_check
          %p306 = pneg %p85
        $region38: #{tpu_custom_call.1} parent=31 // pred_check_branch
          %308 = sbr.rel (%p306) target = $region40
        $region39: #{tpu_custom_call.1} parent=31 // pred_region
          %s309 = sand.u32 %s23, 1
          %s310 = scalar_lea.sflag [#allocation6], %s309
          %s311 = sand.u32 %s75, 1
          %s312 = smul.addr %s311, 64
          %s313 = scalar_lea.vmem [#allocation5], %s312
          %s314 = smul.u32 8, %s31
          %316 = vsyncadd %s310, 0
          %s317 = smul.addr %s30, 8
          %s318 = sadd.s32 %s314, %s317
          %s319 = smul.addr %s318, 8
          %s320 = scalar_lea.hbm %s1, %s319
          %s321 = sshll.u32 %s320, 4
          %s322 = int_to_ptr.hbm [resolvable:$true] %s321
          %s323 = sshll.u32 %s313, 4
          %s324 = int_to_ptr.vmem [resolvable:$true] %s323
          %329 = dma.hbm_to_vmem [thread:$0]  %s322, 1024, %s324, %s310, 128, 128, 8
        $region40: #{tpu_custom_call.1} parent=31 // pred_fallthru
          _
        // Predicated region
        $region41: #{tpu_custom_call.1} parent=31 // pred_check
          %p330 = pneg %p111
        $region42: #{tpu_custom_call.1} parent=31 // pred_check_branch
          %332 = sbr.rel (%p330) target = $region44
        $region43: #{tpu_custom_call.1} parent=31 // pred_region
          %s333 = sand.u32 %s23, 1
          %s334 = scalar_lea.sflag [#allocation6], %s333
          %s335 = sand.u32 %s101, 1
          %s336 = scalar_lea.vmem [#allocation7], %s335
          %338 = vsyncadd %s334, 0
          %s339 = scalar_lea.hbm %s2, %s30
          %s341 = sshll.u32 %s339, 4
          %s342 = int_to_ptr.hbm [resolvable:$true] %s341
          %s343 = sshll.u32 %s336, 4
          %s344 = int_to_ptr.vmem [resolvable:$true] %s343
          %346 = dma.hbm_to_vmem [thread:$0]  %s342, 16, %s344, %s334
        $region44: #{tpu_custom_call.1} parent=31 // pred_fallthru
          _
      $region32: #{tpu_custom_call.1} parent=5 // pred_fallthru
        _
      %p347 = scmp.le.s32.totalorder 1, %s23
      %p348 = scmp.lt.s32.totalorder %s23, 3
      %p349 = pnand %p347, %p348
      %p350 = pneg %p349
      // Predicated region
      $region45: #{tpu_custom_call.1} parent=5 // pred_check
        _
      $region46: #{tpu_custom_call.1} parent=5 // pred_check_branch
        %352 = sbr.rel (%p349) target = $region48
      $region47: #{tpu_custom_call.1} parent=5 // pred_region
        %s353 = ssub.s32 %s23, 1
        %s354 = sand.u32 %s50, 1
        %s355 = scalar_lea.sflag [#allocation3], %s354
        %s356 = sand.u32 %s50, 1
        %s357 = smul.addr %s356, 64
        %s358 = scalar_lea.vmem [#allocation2], %s357
        // Predicated region
        $region49: #{tpu_custom_call.1} parent=47 // pred_check
          %p359 = pneg %p63
        $region50: #{tpu_custom_call.1} parent=47 // pred_check_branch
          %361 = sbr.rel (%p359) target = $region52
        $region51: #{tpu_custom_call.1} parent=47 // pred_region
          %363 = dma.done %s355, 1024
        $region52: #{tpu_custom_call.1} parent=47 // pred_fallthru
          _
        %s364 = sand.u32 %s28, 1
        %s365 = scalar_lea.sflag [#allocation6], %s364
        %s366 = sand.u32 %s78, 1
        %s367 = smul.addr %s366, 64
        %s368 = scalar_lea.vmem [#allocation5], %s367
        // Predicated region
        $region53: #{tpu_custom_call.1} parent=47 // pred_check
          %p369 = pneg %p91
        $region54: #{tpu_custom_call.1} parent=47 // pred_check_branch
          %371 = sbr.rel (%p369) target = $region56
        $region55: #{tpu_custom_call.1} parent=47 // pred_region
          %373 = dma.done %s365, 1024
        $region56: #{tpu_custom_call.1} parent=47 // pred_fallthru
          _
        %s374 = sand.u32 %s28, 1
        %s375 = scalar_lea.sflag [#allocation6], %s374
        %s376 = sand.u32 %s104, 1
        %s377 = scalar_lea.vmem [#allocation7], %s376
        // Predicated region
        $region57: #{tpu_custom_call.1} parent=47 // pred_check
          %p378 = pneg %p117
        $region58: #{tpu_custom_call.1} parent=47 // pred_check_branch
          %380 = sbr.rel (%p378) target = $region60
        $region59: #{tpu_custom_call.1} parent=47 // pred_region
          %382 = dma.done %s375, 16
        $region60: #{tpu_custom_call.1} parent=47 // pred_fallthru
          _
        // Predicated region
        $region61: #{tpu_custom_call.1} parent=47 // pred_check
          %p383 = pneg %p138
        $region62: #{tpu_custom_call.1} parent=47 // pred_check_branch
          %385 = sbr.rel (%p383) target = $region64
        $region63: #{tpu_custom_call.1} parent=47 // pred_region
          %387 = dma.done [#allocation9], 2048
        $region64: #{tpu_custom_call.1} parent=47 // pred_fallthru
          _
        // Predicated region
        $region65: #{tpu_custom_call.1} parent=47 // pred_check
          %p388 = pneg %p180
        $region66: #{tpu_custom_call.1} parent=47 // pred_check_branch
          %390 = sbr.rel (%p388) target = $region68
        $region67: #{tpu_custom_call.1} parent=47 // pred_region
          %392 = dma.done [#allocation9], 2048
        $region68: #{tpu_custom_call.1} parent=47 // pred_fallthru
          _
        %s393 = sand.u32 %s50, 1
        %s394 = scalar_lea.sflag [#allocation3], %s393
        %s395 = sand.u32 %s50, 1
        %s396 = smul.addr %s395, 64
        %s397 = scalar_lea.vmem [#allocation2], %s396
        %p398 = pneg %p63
        %p399 = pneg %p60
        %s400 = sand.u32 %s28, 1
        %s401 = scalar_lea.sflag [#allocation6], %s400
        %s402 = sand.u32 %s78, 1
        %s403 = smul.addr %s402, 64
        %s404 = scalar_lea.vmem [#allocation5], %s403
        %p405 = pneg %p91
        %p406 = pneg %p88
        %s407 = sand.u32 %s28, 1
        %s408 = scalar_lea.sflag [#allocation6], %s407
        %s409 = sand.u32 %s104, 1
        %s410 = scalar_lea.vmem [#allocation7], %s409
        %p411 = pneg %p117
        %p412 = pneg %p114
        %p413 = pneg %p138
        %p414 = pneg %p135
        %p415 = pneg %p159
        %p416 = pneg %p156
        %p417 = pneg %p180
        %p418 = pneg %p177
        %p419 = pneg %p201
        %p420 = pneg %p198
        %p421 = pneg %p229
        %p422 = pneg %p226
        %s423 = sand.u32 %s216, 1
        %s424 = scalar_lea.sflag [#allocation4], %s423
        %s425 = sand.u32 %s216, 1
        %s426 = smul.addr %s425, 64
        %s427 = scalar_lea.vmem [#allocation11], %s426
        %s428 = smul.u32 8, %s33
        %s429 = smul.u32 8, %s33
        %s430 = smul.u32 8, %s33
        %v431 = vld [vmem:[%s358] sm:$0xff]
        %v432 = vld [vmem:[%s358 + $0x8] sm:$0xff]
        %v433 = vld [vmem:[%s358 + $0x10] sm:$0xff]
        %v434 = vld [vmem:[%s358 + $0x18] sm:$0xff]
        %v435 = vld [vmem:[%s358 + $0x20] sm:$0xff]
        %v436 = vld [vmem:[%s358 + $0x28] sm:$0xff]
        %v437 = vld [vmem:[%s358 + $0x30] sm:$0xff]
        %v438 = vld [vmem:[%s358 + $0x38] sm:$0xff]
        %v439 = vld [vmem:[%s368] sm:$0xff]
        %v440 = vld [vmem:[%s368 + $0x8] sm:$0xff]
        %v441 = vld [vmem:[%s368 + $0x10] sm:$0xff]
        %v442 = vld [vmem:[%s368 + $0x18] sm:$0xff]
        %v443 = vld [vmem:[%s368 + $0x20] sm:$0xff]
        %v444 = vld [vmem:[%s368 + $0x28] sm:$0xff]
        %v445 = vld [vmem:[%s368 + $0x30] sm:$0xff]
        %v446 = vld [vmem:[%s368 + $0x38] sm:$0xff]
        %v447 = vadd.f32 %v431, %v439
        %v448 = vadd.f32 %v432, %v440
        %v449 = vadd.f32 %v433, %v441
        %v450 = vadd.f32 %v434, %v442
        %v451 = vadd.f32 %v435, %v443
        %v452 = vadd.f32 %v436, %v444
        %v453 = vadd.f32 %v437, %v445
        %v454 = vadd.f32 %v438, %v446
        %v455 = vld [vmem:[#allocation8] sm:$0xff]
        %v456 = vld [vmem:[#allocation8 + $0x8] sm:$0xff]
        %v457 = vld [vmem:[#allocation8 + $0x10] sm:$0xff]
        %v458 = vld [vmem:[#allocation8 + $0x18] sm:$0xff]
        %v459 = vld [vmem:[#allocation8 + $0x20] sm:$0xff]
        %v460 = vld [vmem:[#allocation8 + $0x28] sm:$0xff]
        %v461 = vld [vmem:[#allocation8 + $0x30] sm:$0xff]
        %v462 = vld [vmem:[#allocation8 + $0x38] sm:$0xff]
        %v463 = vld [vmem:[#allocation8 + $0x40] sm:$0xff]
        %v464 = vld [vmem:[#allocation8 + $0x48] sm:$0xff]
        %v465 = vld [vmem:[#allocation8 + $0x50] sm:$0xff]
        %v466 = vld [vmem:[#allocation8 + $0x58] sm:$0xff]
        %v467 = vld [vmem:[#allocation8 + $0x60] sm:$0xff]
        %v468 = vld [vmem:[#allocation8 + $0x68] sm:$0xff]
        %v469 = vld [vmem:[#allocation8 + $0x70] sm:$0xff]
        %v470 = vld [vmem:[#allocation8 + $0x78] sm:$0xff]
        %v471 = vld [vmem:[%s4] sm:$0x1]
        %v473 = vperm.slane %v471, 0
        %475 = vmatpush.msra.mxu0 %v470
        %476 = vmatpush.msra.mxu0 %v469
        %477 = vmatpush.msra.mxu0 %v468
        %478 = vmatpush.msra.mxu0 %v467
        %479 = vmatpush.msra.mxu0 %v466
        %480 = vmatpush.msra.mxu0 %v465
        %481 = vmatpush.msra.mxu0 %v464
        %482 = vmatpush.msra.mxu0 %v463
        %483 = vmatpush.msra.mxu0 %v462
        %484 = vmatpush.msra.mxu0 %v461
        %485 = vmatpush.msra.mxu0 %v460
        %486 = vmatpush.msra.mxu0 %v459
        %487 = vmatpush.msra.mxu0 %v458
        %488 = vmatpush.msra.mxu0 %v457
        %489 = vmatpush.msra.mxu0 %v456
        %490 = vmatpush.msra.mxu0 %v455
        %491 = vmatmul.f32.gmra.mxu0 %v447
        %v492 = vpop.f32.mrf.mxu0
        %v493 = vadd.f32 %v473, %v492
        %494 = vmatmul.f32.gmra.mxu0 %v448
        %v495 = vpop.f32.mrf.mxu0
        %v496 = vadd.f32 %v473, %v495
        %497 = vmatmul.f32.gmra.mxu0 %v449
        %v498 = vpop.f32.mrf.mxu0
        %v499 = vadd.f32 %v473, %v498
        %500 = vmatmul.f32.gmra.mxu0 %v450
        %v501 = vpop.f32.mrf.mxu0
        %v502 = vadd.f32 %v473, %v501
        %503 = vmatmul.f32.gmra.mxu0 %v451
        %v504 = vpop.f32.mrf.mxu0
        %v505 = vadd.f32 %v473, %v504
        %506 = vmatmul.f32.gmra.mxu0 %v452
        %v507 = vpop.f32.mrf.mxu0
        %v508 = vadd.f32 %v473, %v507
        %509 = vmatmul.f32.gmra.mxu0 %v453
        %v510 = vpop.f32.mrf.mxu0
        %v511 = vadd.f32 %v473, %v510
        %512 = vmatmul.f32.gmra.mxu0 %v454
        %v513 = vpop.f32.mrf.mxu0
        %v514 = vadd.f32 %v473, %v513
        %515 = vdwg.mxu0
        %v516 = vmax.f32 %v493, 0.0
        %v517 = vmax.f32 %v496, 0.0
        %v518 = vmax.f32 %v499, 0.0
        %v519 = vmax.f32 %v502, 0.0
        %v520 = vmax.f32 %v505, 0.0
        %v521 = vmax.f32 %v508, 0.0
        %v522 = vmax.f32 %v511, 0.0
        %v523 = vmax.f32 %v514, 0.0
        %v524 = vld [vmem:[#allocation10] sm:$0xff]
        %v525 = vld [vmem:[#allocation10 + $0x8] sm:$0xff]
        %v526 = vld [vmem:[#allocation10 + $0x10] sm:$0xff]
        %v527 = vld [vmem:[#allocation10 + $0x18] sm:$0xff]
        %v528 = vld [vmem:[#allocation10 + $0x20] sm:$0xff]
        %v529 = vld [vmem:[#allocation10 + $0x28] sm:$0xff]
        %v530 = vld [vmem:[#allocation10 + $0x30] sm:$0xff]
        %v531 = vld [vmem:[#allocation10 + $0x38] sm:$0xff]
        %v532 = vld [vmem:[#allocation10 + $0x40] sm:$0xff]
        %v533 = vld [vmem:[#allocation10 + $0x48] sm:$0xff]
        %v534 = vld [vmem:[#allocation10 + $0x50] sm:$0xff]
        %v535 = vld [vmem:[#allocation10 + $0x58] sm:$0xff]
        %v536 = vld [vmem:[#allocation10 + $0x60] sm:$0xff]
        %v537 = vld [vmem:[#allocation10 + $0x68] sm:$0xff]
        %v538 = vld [vmem:[#allocation10 + $0x70] sm:$0xff]
        %v539 = vld [vmem:[#allocation10 + $0x78] sm:$0xff]
        %v540 = vld [vmem:[%s6] sm:$0x1]
        %v542 = vperm.slane %v540, 0
        %544 = vmatpush.msra.mxu0 %v539
        %545 = vmatpush.msra.mxu0 %v538
        %546 = vmatpush.msra.mxu0 %v537
        %547 = vmatpush.msra.mxu0 %v536
        %548 = vmatpush.msra.mxu0 %v535
        %549 = vmatpush.msra.mxu0 %v534
        %550 = vmatpush.msra.mxu0 %v533
        %551 = vmatpush.msra.mxu0 %v532
        %552 = vmatpush.msra.mxu0 %v531
        %553 = vmatpush.msra.mxu0 %v530
        %554 = vmatpush.msra.mxu0 %v529
        %555 = vmatpush.msra.mxu0 %v528
        %556 = vmatpush.msra.mxu0 %v527
        %557 = vmatpush.msra.mxu0 %v526
        %558 = vmatpush.msra.mxu0 %v525
        %559 = vmatpush.msra.mxu0 %v524
        %560 = vmatmul.f32.gmra.mxu0 %v516
        %v561 = vpop.f32.mrf.mxu0
        %v562 = vadd.f32 %v542, %v561
        %563 = vmatmul.f32.gmra.mxu0 %v517
        %v564 = vpop.f32.mrf.mxu0
        %v565 = vadd.f32 %v542, %v564
        %566 = vmatmul.f32.gmra.mxu0 %v518
        %v567 = vpop.f32.mrf.mxu0
        %v568 = vadd.f32 %v542, %v567
        %569 = vmatmul.f32.gmra.mxu0 %v519
        %v570 = vpop.f32.mrf.mxu0
        %v571 = vadd.f32 %v542, %v570
        %572 = vmatmul.f32.gmra.mxu0 %v520
        %v573 = vpop.f32.mrf.mxu0
        %v574 = vadd.f32 %v542, %v573
        %575 = vmatmul.f32.gmra.mxu0 %v521
        %v576 = vpop.f32.mrf.mxu0
        %v577 = vadd.f32 %v542, %v576
        %578 = vmatmul.f32.gmra.mxu0 %v522
        %v579 = vpop.f32.mrf.mxu0
        %v580 = vadd.f32 %v542, %v579
        %581 = vmatmul.f32.gmra.mxu0 %v523
        %v582 = vpop.f32.mrf.mxu0
        %v583 = vadd.f32 %v542, %v582
        %584 = vdwg.mxu0
        %v585 = vld [vmem:[%s377] sm:$0x1]
        %v587 = vperm.slane %v585, 0
        %v589 = vadd.f32 %v562, %v587
        %v590 = vadd.f32 %v565, %v587
        %v591 = vadd.f32 %v568, %v587
        %v592 = vadd.f32 %v571, %v587
        %v593 = vadd.f32 %v574, %v587
        %v594 = vadd.f32 %v577, %v587
        %v595 = vadd.f32 %v580, %v587
        %v596 = vadd.f32 %v583, %v587
        %v597 = vxor.u32 %v589, 2147483648
        %v598 = vxor.u32 %v590, 2147483648
        %v599 = vxor.u32 %v591, 2147483648
        %v600 = vxor.u32 %v592, 2147483648
        %v601 = vxor.u32 %v593, 2147483648
        %v602 = vxor.u32 %v594, 2147483648
        %v603 = vxor.u32 %v595, 2147483648
        %v604 = vxor.u32 %v596, 2147483648
        %v605 = vmul.f32 %v597, 1.442695
        %v606 = vpow.pop %v605
        %v607 = vmul.f32 %v598, 1.442695
        %v608 = vpow.pop %v607
        %v609 = vmul.f32 %v599, 1.442695
        %v610 = vpow.pop %v609
        %v611 = vmul.f32 %v600, 1.442695
        %v612 = vpow.pop %v611
        %v613 = vmul.f32 %v601, 1.442695
        %v614 = vpow.pop %v613
        %v615 = vmul.f32 %v602, 1.442695
        %v616 = vpow.pop %v615
        %v617 = vmul.f32 %v603, 1.442695
        %v618 = vpow.pop %v617
        %v619 = vmul.f32 %v604, 1.442695
        %v620 = vpow.pop %v619
        %v621 = vadd.f32 %v606, 1.0
        %v622 = vadd.f32 %v608, 1.0
        %v623 = vadd.f32 %v610, 1.0
        %v624 = vadd.f32 %v612, 1.0
        %v625 = vadd.f32 %v614, 1.0
        %v626 = vadd.f32 %v616, 1.0
        %v627 = vadd.f32 %v618, 1.0
        %v628 = vadd.f32 %v620, 1.0
        %v629 = vrcp.pop %v621
        %v630 = vmul.f32 %v621, %v629
        %v631 = vsub.f32 1.0, %v630
        %v632 = vmul.f32 %v629, %v631
        %v633 = vadd.f32 %v629, %v632
        %vm634 = vweird.f32 %v621
        %vm635 = vweird.f32 %v629
        %vm636 = vmor %vm634, %vm635
        %v637 = vsel %vm636, %v629, %v633
        %v638 = vand.u32 2147483647, %v621
        %vm639 = vcmp.eq.f32.partialorder %v638, 8.507059e+37
        %v640 = vand.u32 %v621, 2147483648
        %v641 = vor.u32 1.1754944e-38, %v640
        %v642 = vsel %vm639, %v641, %v637
        %v643 = vmul.f32 1.0, %v642
        %v644 = vrcp.pop %v622
        %v645 = vmul.f32 %v622, %v644
        %v646 = vsub.f32 1.0, %v645
        %v647 = vmul.f32 %v644, %v646
        %v648 = vadd.f32 %v644, %v647
        %vm649 = vweird.f32 %v622
        %vm650 = vweird.f32 %v644
        %vm651 = vmor %vm649, %vm650
        %v652 = vsel %vm651, %v644, %v648
        %v653 = vand.u32 2147483647, %v622
        %vm654 = vcmp.eq.f32.partialorder %v653, 8.507059e+37
        %v655 = vand.u32 %v622, 2147483648
        %v656 = vor.u32 1.1754944e-38, %v655
        %v657 = vsel %vm654, %v656, %v652
        %v658 = vmul.f32 1.0, %v657
        %v659 = vrcp.pop %v623
        %v660 = vmul.f32 %v623, %v659
        %v661 = vsub.f32 1.0, %v660
        %v662 = vmul.f32 %v659, %v661
        %v663 = vadd.f32 %v659, %v662
        %vm664 = vweird.f32 %v623
        %vm665 = vweird.f32 %v659
        %vm666 = vmor %vm664, %vm665
        %v667 = vsel %vm666, %v659, %v663
        %v668 = vand.u32 2147483647, %v623
        %vm669 = vcmp.eq.f32.partialorder %v668, 8.507059e+37
        %v670 = vand.u32 %v623, 2147483648
        %v671 = vor.u32 1.1754944e-38, %v670
        %v672 = vsel %vm669, %v671, %v667
        %v673 = vmul.f32 1.0, %v672
        %v674 = vrcp.pop %v624
        %v675 = vmul.f32 %v624, %v674
        %v676 = vsub.f32 1.0, %v675
        %v677 = vmul.f32 %v674, %v676
        %v678 = vadd.f32 %v674, %v677
        %vm679 = vweird.f32 %v624
        %vm680 = vweird.f32 %v674
        %vm681 = vmor %vm679, %vm680
        %v682 = vsel %vm681, %v674, %v678
        %v683 = vand.u32 2147483647, %v624
        %vm684 = vcmp.eq.f32.partialorder %v683, 8.507059e+37
        %v685 = vand.u32 %v624, 2147483648
        %v686 = vor.u32 1.1754944e-38, %v685
        %v687 = vsel %vm684, %v686, %v682
        %v688 = vmul.f32 1.0, %v687
        %v689 = vrcp.pop %v625
        %v690 = vmul.f32 %v625, %v689
        %v691 = vsub.f32 1.0, %v690
        %v692 = vmul.f32 %v689, %v691
        %v693 = vadd.f32 %v689, %v692
        %vm694 = vweird.f32 %v625
        %vm695 = vweird.f32 %v689
        %vm696 = vmor %vm694, %vm695
        %v697 = vsel %vm696, %v689, %v693
        %v698 = vand.u32 2147483647, %v625
        %vm699 = vcmp.eq.f32.partialorder %v698, 8.507059e+37
        %v700 = vand.u32 %v625, 2147483648
        %v701 = vor.u32 1.1754944e-38, %v700
        %v702 = vsel %vm699, %v701, %v697
        %v703 = vmul.f32 1.0, %v702
        %v704 = vrcp.pop %v626
        %v705 = vmul.f32 %v626, %v704
        %v706 = vsub.f32 1.0, %v705
        %v707 = vmul.f32 %v704, %v706
        %v708 = vadd.f32 %v704, %v707
        %vm709 = vweird.f32 %v626
        %vm710 = vweird.f32 %v704
        %vm711 = vmor %vm709, %vm710
        %v712 = vsel %vm711, %v704, %v708
        %v713 = vand.u32 2147483647, %v626
        %vm714 = vcmp.eq.f32.partialorder %v713, 8.507059e+37
        %v715 = vand.u32 %v626, 2147483648
        %v716 = vor.u32 1.1754944e-38, %v715
        %v717 = vsel %vm714, %v716, %v712
        %v718 = vmul.f32 1.0, %v717
        %v719 = vrcp.pop %v627
        %v720 = vmul.f32 %v627, %v719
        %v721 = vsub.f32 1.0, %v720
        %v722 = vmul.f32 %v719, %v721
        %v723 = vadd.f32 %v719, %v722
        %vm724 = vweird.f32 %v627
        %vm725 = vweird.f32 %v719
        %vm726 = vmor %vm724, %vm725
        %v727 = vsel %vm726, %v719, %v723
        %v728 = vand.u32 2147483647, %v627
        %vm729 = vcmp.eq.f32.partialorder %v728, 8.507059e+37
        %v730 = vand.u32 %v627, 2147483648
        %v731 = vor.u32 1.1754944e-38, %v730
        %v732 = vsel %vm729, %v731, %v727
        %v733 = vmul.f32 1.0, %v732
        %v734 = vrcp.pop %v628
        %v735 = vmul.f32 %v628, %v734
        %v736 = vsub.f32 1.0, %v735
        %v737 = vmul.f32 %v734, %v736
        %v738 = vadd.f32 %v734, %v737
        %vm739 = vweird.f32 %v628
        %vm740 = vweird.f32 %v734
        %vm741 = vmor %vm739, %vm740
        %v742 = vsel %vm741, %v734, %v738
        %v743 = vand.u32 2147483647, %v628
        %vm744 = vcmp.eq.f32.partialorder %v743, 8.507059e+37
        %v745 = vand.u32 %v628, 2147483648
        %v746 = vor.u32 1.1754944e-38, %v745
        %v747 = vsel %vm744, %v746, %v742
        %v748 = vmul.f32 1.0, %v747
        %v749 = vsub.f32 %v431, %v439
        %v750 = vsub.f32 %v432, %v440
        %v751 = vsub.f32 %v433, %v441
        %v752 = vsub.f32 %v434, %v442
        %v753 = vsub.f32 %v435, %v443
        %v754 = vsub.f32 %v436, %v444
        %v755 = vsub.f32 %v437, %v445
        %v756 = vsub.f32 %v438, %v446
        %v757 = vmul.f32 %v643, %v749
        %v758 = vmul.f32 %v658, %v750
        %v759 = vmul.f32 %v673, %v751
        %v760 = vmul.f32 %v688, %v752
        %v761 = vmul.f32 %v703, %v753
        %v762 = vmul.f32 %v718, %v754
        %v763 = vmul.f32 %v733, %v755
        %v764 = vmul.f32 %v748, %v756
        %v765 = vadd.f32 %v439, %v757
        %v766 = vadd.f32 %v440, %v758
        %v767 = vadd.f32 %v441, %v759
        %v768 = vadd.f32 %v442, %v760
        %v769 = vadd.f32 %v443, %v761
        %v770 = vadd.f32 %v444, %v762
        %v771 = vadd.f32 %v445, %v763
        %v772 = vadd.f32 %v446, %v764
        %v773 = vmul.f32 %v765, 2.0
        %v774 = vmul.f32 %v766, 2.0
        %v775 = vmul.f32 %v767, 2.0
        %v776 = vmul.f32 %v768, 2.0
        %v777 = vmul.f32 %v769, 2.0
        %v778 = vmul.f32 %v770, 2.0
        %v779 = vmul.f32 %v771, 2.0
        %v780 = vmul.f32 %v772, 2.0
        %781 = vst [vmem:[%s427] sm:$0xff] %v773
        %782 = vst [vmem:[%s427 + $0x8] sm:$0xff] %v774
        %783 = vst [vmem:[%s427 + $0x10] sm:$0xff] %v775
        %784 = vst [vmem:[%s427 + $0x18] sm:$0xff] %v776
        %785 = vst [vmem:[%s427 + $0x20] sm:$0xff] %v777
        %786 = vst [vmem:[%s427 + $0x28] sm:$0xff] %v778
        %787 = vst [vmem:[%s427 + $0x30] sm:$0xff] %v779
        %788 = vst [vmem:[%s427 + $0x38] sm:$0xff] %v780
        %s789 = sand.u32 %s216, 1
        %s790 = scalar_lea.sflag [#allocation4], %s789
        %s791 = sand.u32 %s216, 1
        %s792 = smul.addr %s791, 64
        %s793 = scalar_lea.vmem [#allocation11], %s792
        // Predicated region
        $region69: #{tpu_custom_call.1} parent=47 // pred_check
          %p794 = pneg %p226
        $region70: #{tpu_custom_call.1} parent=47 // pred_check_branch
          %796 = sbr.rel (%p794) target = $region72
        $region71: #{tpu_custom_call.1} parent=47 // pred_region
          %s797 = smul.u32 8, %s33
          %799 = vsyncadd %s790, 0
          %s800 = smul.addr %s32, 8
          %s801 = sadd.s32 %s797, %s800
          %s802 = smul.addr %s801, 8
          %s803 = scalar_lea.hbm %s7, %s802
          %s804 = sshll.u32 %s793, 4
          %s805 = int_to_ptr.vmem [resolvable:$true] %s804
          %s806 = sshll.u32 %s803, 4
          %s807 = int_to_ptr.hbm [resolvable:$true] %s806
          %812 = dma.vmem_to_hbm [thread:$0]  %s805, 1024, %s807, %s790, 128, 128, 8
        $region72: #{tpu_custom_call.1} parent=47 // pred_fallthru
          _
      $region48: #{tpu_custom_call.1} parent=5 // pred_fallthru
        _
      %p813 = scmp.le.s32.totalorder 2, %s23
      // Predicated region
      $region73: #{tpu_custom_call.1} parent=5 // pred_check
        %p814 = pneg %p813
      $region74: #{tpu_custom_call.1} parent=5 // pred_check_branch
        %816 = sbr.rel (%p814) target = $region76
      $region75: #{tpu_custom_call.1} parent=5 // pred_region
        %s817 = ssub.s32 %s23, 2
        // Predicated region
        $region77: #{tpu_custom_call.1} parent=75 // pred_check
          %p818 = pneg %p232
        $region78: #{tpu_custom_call.1} parent=75 // pred_check_branch
          %820 = sbr.rel (%p818) target = $region80
        $region79: #{tpu_custom_call.1} parent=75 // pred_region
          %s821 = sand.u32 %s217, 1
          %s822 = scalar_lea.sflag [#allocation4], %s821
          %s823 = sand.u32 %s217, 1
          %s824 = smul.addr %s823, 64
          %s825 = scalar_lea.vmem [#allocation11], %s824
          %827 = dma.done %s822, 1024
        $region80: #{tpu_custom_call.1} parent=75 // pred_fallthru
          _
      $region76: #{tpu_custom_call.1} parent=5 // pred_fallthru
        _
    $region6: #{tpu_custom_call.1} parent=1 // loop_footer
      %s27 = sadd.s32 1, %s23
    $region7: #{tpu_custom_call.1} parent=1 // loop_footer_branch
      %22 = sbr.rel target = $region3
    $region8: #{tpu_custom_call.1} parent=1 // loop_exit
      _
    %828 = vsyncpa [#allocation3], 1
    %s829 = scalar_lea.sflag [#allocation3], 1
    %830 = vsyncpa %s829, 1
    %831 = vsyncpa [#allocation6], 1
    %s832 = scalar_lea.sflag [#allocation6], 1
    %833 = vsyncpa %s832, 1
    %834 = vsyncpa [#allocation9], 1
    %835 = vsyncpa [#allocation4], 1
    %s836 = scalar_lea.sflag [#allocation4], 1
    %837 = vsyncpa %s836, 1

</llo_original>
